<compile_context>
chip_gen: v5e
topology: v5e:2x2
jax: 0.10.0
libtpu: 0.0.40
codegen_flags: <defaults>
</compile_context>

<pallas_src>
import functools
import math

import jax
import jax.numpy as jnp
from jax.experimental import pallas as pl
from jax.experimental.pallas import tpu as pltpu


def _round_up(n, m):
    return ((n + m - 1) // m) * m


def _self_output_kernel(x_ref, res_ref, w_ref, b_ref, g_ref, bt_ref, o_ref, *, eps):
    """Fused Linear + bias + residual + LayerNorm for one row-tile.

    x_ref, res_ref, o_ref : (tile_m, dims)
    w_ref                 : (dims, dims)   (pre-transposed: y = x @ w)
    b_ref, g_ref, bt_ref  : (1, dims)
    """
    x = x_ref[...]
    # MXU matmul, f32 accumulation.
    h = jnp.dot(x, w_ref[...], preferred_element_type=jnp.float32)
    h = h + b_ref[...].astype(jnp.float32)
    # TODO(synk): train-mode dropout would need pltpu.prng_seed +
    #             pltpu.stateful_bernoulli; eval-mode dropout is identity.
    z = res_ref[...].astype(jnp.float32) + h
    # LayerNorm over the last (lane) axis, all in f32.
    mean = jnp.mean(z, axis=-1, keepdims=True)
    zc = z - mean
    var = jnp.mean(zc * zc, axis=-1, keepdims=True)
    inv = jax.lax.rsqrt(var + eps)
    y = zc * inv * g_ref[...].astype(jnp.float32) + bt_ref[...].astype(jnp.float32)
    o_ref[...] = y.astype(o_ref.dtype)


def _choose_tile(m, dims, tile_m, in_bytes, out_bytes, w_bytes, budget_bytes):
    """Row tile: multiple of 8, >= 2 grid steps when possible, fits VMEM budget."""
    tile = min(tile_m, max(8, _round_up(pl.cdiv(m, 2), 8)))
    tile = max(8, _round_up(tile, 8))

    def vmem_need(t):
        return (2 * 2 * t * dims * in_bytes      # x + residual, double-buffered
                + 2 * t * dims * out_bytes       # output, double-buffered
                + 2 * dims * dims * w_bytes      # resident weight (double-buffered)
                + 2 * t * dims * 4               # f32 matmul / LN intermediates
                + 3 * 8 * dims * 4)              # bias / gamma / beta (padded)

    while tile > 8 and vmem_need(tile) > budget_bytes:
        tile = max(8, _round_up(tile // 2, 8))
    return tile, vmem_need(tile)


def self_output_forward(x, input_x, w_t, bias, gamma, beta, *, eps=1e-12, tile_m=512):
    """Pallas equivalent of SelfOutput.forward (eval mode).

    x, input_x : (..., dims)
    w_t        : (dims, dims)  pre-transposed Linear weight, i.e. weight.T (in, out)
    bias       : (dims,)
    gamma,beta : (dims,)       LayerNorm affine params
    """
    assert x.shape == input_x.shape
    dims = x.shape[-1]
    assert w_t.shape == (dims, dims)

    orig_shape = x.shape
    m = math.prod(orig_shape[:-1])
    x2 = x.reshape(m, dims)
    r2 = input_x.reshape(m, dims)
    b2 = bias.reshape(1, dims)
    g2 = gamma.reshape(1, dims)
    bt2 = beta.reshape(1, dims)

    # Keep the whole footprint inside v7x's 64 MiB VMEM (with headroom); v5e/v6e
    # have more, but 512-row tiles already sit on the HBM roofline plateau.
    budget = 48 << 20
    tile, need = _choose_tile(
        m, dims, tile_m,
        in_bytes=x2.dtype.itemsize,
        out_bytes=x.dtype.itemsize,
        w_bytes=w_t.dtype.itemsize,
        budget_bytes=budget,
    )
    grid = (pl.cdiv(m, tile),)  # ragged final block handled by Pallas masking
    vmem_limit = int(min(max(need + (8 << 20), 32 << 20), 60 << 20))

    kernel = functools.partial(_self_output_kernel, eps=eps)

    out = pl.pallas_call(
        kernel,
        out_shape=jax.ShapeDtypeStruct((m, dims), x.dtype),
        grid_spec=pltpu.PrefetchScalarGridSpec(
            num_scalar_prefetch=0,
            grid=grid,
            in_specs=[
                pl.BlockSpec((tile, dims), lambda i: (i, 0)),   # x rows
                pl.BlockSpec((tile, dims), lambda i: (i, 0)),   # residual rows
                pl.BlockSpec((dims, dims), lambda i: (0, 0)),   # weight (resident)
                pl.BlockSpec((1, dims), lambda i: (0, 0)),      # bias
                pl.BlockSpec((1, dims), lambda i: (0, 0)),      # gamma
                pl.BlockSpec((1, dims), lambda i: (0, 0)),      # beta
            ],
            out_specs=pl.BlockSpec((tile, dims), lambda i: (i, 0)),
        ),
        compiler_params=pltpu.CompilerParams(
            dimension_semantics=("parallel",),
            vmem_limit_bytes=vmem_limit),
    )(x2, r2, w_t, b2, g2, bt2)

    return out.reshape(orig_shape)


def _reference(x, input_x, weight, bias, gamma, beta, eps=1e-12):
    """Pure-JAX reference mirroring the PyTorch forward (eval mode)."""
    h = x @ weight.T + bias
    z = input_x + h
    mean = z.mean(axis=-1, keepdims=True)
    var = ((z - mean) ** 2).mean(axis=-1, keepdims=True)
    return (z - mean) / jnp.sqrt(var + eps) * gamma + beta


if __name__ == "__main__":
    batch, seq, dims = 2, 8, 64   # module default dims=64

    key = jax.random.PRNGKey(0)
    k_x, k_r, k_w, k_b = jax.random.split(key, 4)

    x = jax.random.normal(k_x, (batch, seq, dims), dtype=jnp.float32)
    input_x = jax.random.normal(k_r, (batch, seq, dims), dtype=jnp.float32)
    # Linear params (PyTorch-style uniform init range ~ 1/sqrt(dims)), in the
    # PyTorch (out, in) layout.
    bound = 1.0 / (dims ** 0.5)
    weight = jax.random.uniform(k_w, (dims, dims), jnp.float32, -bound, bound)
    bias = jax.random.uniform(k_b, (dims,), jnp.float32, -bound, bound)
    # LayerNorm params at their PyTorch init values.
    gamma = jnp.ones((dims,), jnp.float32)
    beta = jnp.zeros((dims,), jnp.float32)

    # One-time "parameter load" transpose (hoisted out of the per-call path).
    w_t = jnp.asarray(weight.T)
    w_t = jax.block_until_ready(w_t)

    out = self_output_forward(x, input_x, w_t, bias, gamma, beta)
    out = jax.block_until_ready(out)

    ref = _reference(x, input_x, weight, bias, gamma, beta)
    assert out.shape == (batch, seq, dims), out.shape
    assert out.dtype == jnp.float32
    assert jnp.allclose(out, ref, atol=1e-5, rtol=1e-5), "mismatch vs reference"

    print("KERNEL_OK")
</pallas_src>

<mosaic_0001>
module attributes {stable_mosaic.version = 11 : i64} {
  func.func @_self_output_kernel(%arg0: i32, %arg1: memref<8x64xf32, #tpu.memory_space<vmem>>, %arg2: memref<8x64xf32, #tpu.memory_space<vmem>>, %arg3: memref<64x64xf32, #tpu.memory_space<vmem>>, %arg4: memref<1x64xf32, #tpu.memory_space<vmem>>, %arg5: memref<1x64xf32, #tpu.memory_space<vmem>>, %arg6: memref<1x64xf32, #tpu.memory_space<vmem>>, %arg7: memref<8x64xf32, #tpu.memory_space<vmem>>) attributes {dimension_semantics = [#tpu.dimension_semantics<parallel>], iteration_bounds = array<i64: 2>, scalar_prefetch = 0 : i64, scratch_operands = 0 : i64, tpu.core_type = #tpu.core_type<tc>, window_params = [{transform_indices = @transform_0, window_bounds = array<i64: 8, 64>}, {transform_indices = @transform_1, window_bounds = array<i64: 8, 64>}, {pipeline_mode = #tpu.pipeline_mode<synchronous>, transform_indices = @transform_2, window_bounds = array<i64: 64, 64>}, {pipeline_mode = #tpu.pipeline_mode<synchronous>, transform_indices = @transform_3, window_bounds = array<i64: 1, 64>}, {pipeline_mode = #tpu.pipeline_mode<synchronous>, transform_indices = @transform_4, window_bounds = array<i64: 1, 64>}, {pipeline_mode = #tpu.pipeline_mode<synchronous>, transform_indices = @transform_5, window_bounds = array<i64: 1, 64>}, {transform_indices = @transform_6, window_bounds = array<i64: 8, 64>}]} {
    %c0 = arith.constant 0 : index
    %c0_0 = arith.constant 0 : index
    %0 = vector.load %arg1[%c0, %c0_0] : memref<8x64xf32, #tpu.memory_space<vmem>>, vector<8x64xf32>
    %c0_1 = arith.constant 0 : index
    %c0_2 = arith.constant 0 : index
    %1 = vector.load %arg3[%c0_1, %c0_2] : memref<64x64xf32, #tpu.memory_space<vmem>>, vector<64x64xf32>
    %cst = arith.constant dense<0.000000e+00> : vector<8x64xf32>
    %2 = tpu.matmul %0, %1, %cst {dimension_numbers = #tpu.dot_dimension_numbers<[1], [0], [0], [1], [0, 0, 1, 1], [], []>} : vector<8x64xf32>, vector<64x64xf32>, vector<8x64xf32> -> vector<8x64xf32>
    %c0_3 = arith.constant 0 : index
    %c0_4 = arith.constant 0 : index
    %3 = vector.load %arg4[%c0_3, %c0_4] : memref<1x64xf32, #tpu.memory_space<vmem>>, vector<1x64xf32>
    %4 = vector.broadcast %3 : vector<1x64xf32> to vector<8x64xf32>
    %5 = arith.addf %2, %4 : vector<8x64xf32>
    %c0_5 = arith.constant 0 : index
    %c0_6 = arith.constant 0 : index
    %6 = vector.load %arg2[%c0_5, %c0_6] : memref<8x64xf32, #tpu.memory_space<vmem>>, vector<8x64xf32>
    %7 = arith.addf %6, %5 : vector<8x64xf32>
    %cst_7 = arith.constant dense<0.000000e+00> : vector<8xf32>
    %8 = vector.multi_reduction <add>, %7, %cst_7 [1] : vector<8x64xf32> to vector<8xf32>
    %9 = vector.shape_cast %8 : vector<8xf32> to vector<8x1xf32>
    %cst_8 = arith.constant 6.400000e+01 : f32
    %10 = vector.broadcast %cst_8 : f32 to vector<8x1xf32>
    %11 = arith.divf %9, %10 : vector<8x1xf32>
    %12 = vector.broadcast %11 : vector<8x1xf32> to vector<8x64xf32>
    %13 = arith.subf %7, %12 : vector<8x64xf32>
    %14 = arith.mulf %13, %13 : vector<8x64xf32>
    %cst_9 = arith.constant dense<0.000000e+00> : vector<8xf32>
    %15 = vector.multi_reduction <add>, %14, %cst_9 [1] : vector<8x64xf32> to vector<8xf32>
    %16 = vector.shape_cast %15 : vector<8xf32> to vector<8x1xf32>
    %cst_10 = arith.constant 6.400000e+01 : f32
    %17 = vector.broadcast %cst_10 : f32 to vector<8x1xf32>
    %18 = arith.divf %16, %17 : vector<8x1xf32>
    %cst_11 = arith.constant 9.99999996E-13 : f32
    %19 = vector.broadcast %cst_11 : f32 to vector<8x1xf32>
    %20 = arith.addf %18, %19 : vector<8x1xf32>
    %21 = math.rsqrt %20 : vector<8x1xf32>
    %22 = vector.broadcast %21 : vector<8x1xf32> to vector<8x64xf32>
    %23 = arith.mulf %13, %22 : vector<8x64xf32>
    %c0_12 = arith.constant 0 : index
    %c0_13 = arith.constant 0 : index
    %24 = vector.load %arg5[%c0_12, %c0_13] : memref<1x64xf32, #tpu.memory_space<vmem>>, vector<1x64xf32>
    %25 = vector.broadcast %24 : vector<1x64xf32> to vector<8x64xf32>
    %26 = arith.mulf %23, %25 : vector<8x64xf32>
    %c0_14 = arith.constant 0 : index
    %c0_15 = arith.constant 0 : index
    %27 = vector.load %arg6[%c0_14, %c0_15] : memref<1x64xf32, #tpu.memory_space<vmem>>, vector<1x64xf32>
    %28 = vector.broadcast %27 : vector<1x64xf32> to vector<8x64xf32>
    %29 = arith.addf %26, %28 : vector<8x64xf32>
    %c0_16 = arith.constant 0 : index
    %c0_17 = arith.constant 0 : index
    %30 = vector.load %arg7[%c0_16, %c0_17] : memref<8x64xf32, #tpu.memory_space<vmem>>, vector<8x64xf32>
    tpu.vector_store %arg7[%c0_16, %c0_17], %29 {strides = array<i32>} : memref<8x64xf32, #tpu.memory_space<vmem>>, vector<8x64xf32>,
    return
  }
  func.func @transform_0(%arg0: i32) -> (i32, i32) {
    %c0_i32 = arith.constant 0 : i32
    %c0_i32_0 = arith.constant 0 : i32
    return %arg0, %c0_i32 : i32, i32
  }
  func.func @transform_1(%arg0: i32) -> (i32, i32) {
    %c0_i32 = arith.constant 0 : i32
    %c0_i32_0 = arith.constant 0 : i32
    return %arg0, %c0_i32 : i32, i32
  }
  func.func @transform_2(%arg0: i32) -> (i32, i32) {
    %c0_i32 = arith.constant 0 : i32
    %c0_i32_0 = arith.constant 0 : i32
    %c0_i32_1 = arith.constant 0 : i32
    return %c0_i32, %c0_i32_0 : i32, i32
  }
  func.func @transform_3(%arg0: i32) -> (i32, i32) {
    %c0_i32 = arith.constant 0 : i32
    %c0_i32_0 = arith.constant 0 : i32
    %c0_i32_1 = arith.constant 0 : i32
    return %c0_i32, %c0_i32_0 : i32, i32
  }
  func.func @transform_4(%arg0: i32) -> (i32, i32) {
    %c0_i32 = arith.constant 0 : i32
    %c0_i32_0 = arith.constant 0 : i32
    %c0_i32_1 = arith.constant 0 : i32
    return %c0_i32, %c0_i32_0 : i32, i32
  }
  func.func @transform_5(%arg0: i32) -> (i32, i32) {
    %c0_i32 = arith.constant 0 : i32
    %c0_i32_0 = arith.constant 0 : i32
    %c0_i32_1 = arith.constant 0 : i32
    return %c0_i32, %c0_i32_0 : i32, i32
  }
  func.func @transform_6(%arg0: i32) -> (i32, i32) {
    %c0_i32 = arith.constant 0 : i32
    %c0_i32_0 = arith.constant 0 : i32
    return %arg0, %c0_i32 : i32, i32
  }
}

</mosaic_0001>

<llo_original>
// kernel: tpu_custom_call.1
$region0: #{tpu_custom_call.1}
  #allocation0 [shape = 'u32[]', space=smem, size = 0x4, offset = 0x4, fixed_abs, tag = 'smem constant byte address 0x4 - core index']
  #allocation1 [shape = 'u32[72,128]{1,0:T(1,128)}', space=vmem, size = 0x9000, scoped, tag = 'internal scratch']
  %s0 = inlined_call_operand.hbm [shape: f32[16,64], index: 0, kind: input, shape index: {}]
  %s1 = inlined_call_operand.hbm [shape: f32[16,64], index: 1, kind: input, shape index: {}]
  %s2 = inlined_call_operand.hbm [shape: f32[64,64], index: 2, kind: input, shape index: {}]
  %s3 = inlined_call_operand.vmem [shape: f32[1,64], index: 3, kind: input, shape index: {}]
  %s4 = inlined_call_operand.vmem [shape: f32[1,64], index: 4, kind: input, shape index: {}]
  %s5 = inlined_call_operand.vmem [shape: f32[1,64], index: 5, kind: input, shape index: {}]
  %s6 = inlined_call_operand.hbm [shape: f32[16,64], index: 6, kind: output, shape index: {}]
  %s7 = sld [smem:[#allocation0]]
  $region69: #{tpu_custom_call.1} parent=0
    _
  %s9 = ssub.s32 1, %s7
  %s10 = scalar_select 0, %s9, %s7
  $region1: #{tpu_custom_call.1} parent=0
    #allocation2 [shape = 'u8[8192]{0}', space=vmem, size = 0x2000, scoped, tag = 'input window, operand 0']
    #allocation3 [shape = 's32[2]{0}', space=sflag, size = 0x8, scoped, tag = 'scoped memory for tpu_custom_call.1']
    #allocation4 [shape = 's32[2]{0}', space=sflag, size = 0x8, scoped, tag = 'scoped memory for tpu_custom_call.1']
    #allocation5 [shape = 'u8[8192]{0}', space=vmem, size = 0x2000, scoped, tag = 'input window, operand 1']
    #allocation6 [shape = 's32[2]{0}', space=sflag, size = 0x8, scoped, tag = 'scoped memory for tpu_custom_call.1']
    #allocation7 [shape = 'u8[32768]{0}', space=vmem, size = 0x8000, scoped, tag = 'input window, operand 2, single buffered']
    #allocation8 [shape = 'u8[8192]{0}', space=vmem, size = 0x2000, scoped, tag = 'output window, operand 0']
    %11 = vsyncpa [#allocation3], 0
    %s12 = scalar_lea.sflag [#allocation3], 1
    %13 = vsyncpa %s12, 0
    %14 = vsyncpa [#allocation6], 0
    %s15 = scalar_lea.sflag [#allocation6], 1
    %16 = vsyncpa %s15, 0
    %17 = vsyncpa [#allocation4], 0
    %s18 = scalar_lea.sflag [#allocation4], 1
    %19 = vsyncpa %s18, 0
    loop: start=0, step=1, limit=4
    $region2: #{tpu_custom_call.1} parent=1 // loop_pre_header
      _
    $region3: #{tpu_custom_call.1} parent=1 // loop_header
      %s21 = sphi 0, %s25
      %p22 = scmp.ge.s32.totalorder %s21, 4
      %s31 = sphi 0, %s33
      %s34 = sphi 0, %s31
      %s35 = sphi 0, %s34
      %s51 = sphi 0, %s35
      %s57 = sphi 0, %s59
      %s60 = sphi 0, %s57
      %s61 = sphi 0, %s60
      %s77 = sphi 0, %s61
      %s81 = sphi 0, %s81
      %s83 = sphi 0, %s81
      %s84 = sphi 0, %s83
      %s98 = sphi 0, %s84
      %s102 = sphi 0, %s102
      %s104 = sphi 0, %s102
      %s105 = sphi 0, %s104
      %s119 = sphi 0, %s105
      %s123 = sphi 0, %s123
      %s125 = sphi 0, %s123
      %s126 = sphi 0, %s125
      %s140 = sphi 0, %s126
      %s144 = sphi 0, %s144
      %s146 = sphi 0, %s144
      %s147 = sphi 0, %s146
      %s161 = sphi 0, %s147
      %s167 = sphi 0, %s169
      %s170 = sphi 0, %s167
      %s171 = sphi 0, %s170
      %s187 = sphi 0, %s171
    $region4: #{tpu_custom_call.1} parent=1 // loop_header_branch
      %24 = sbr.rel (%p22) target = $region8
    $region5: #{tpu_custom_call.1} parent=1 // loop_body
      %s26 = ssub.s32 %s21, 1
      %s27 = ssub.s32 %s21, 2
      %s28 = sadd.s32 %s21, 1
      %s29 = ssub.s32 %s21, %s28
      %p30 = scmp.eq.s32.totalorder %s29, 0
      %s32 = sadd.s32 %s31, 1
      %s33 = scalar_select %p30, %s31, %s32
      %p36 = pneg %p30
      %p37 = scmp.eq.s32.totalorder %s21, 1
      %p38 = por %p36, %p37
      %p39 = scmp.ne.s32.totalorder %s31, %s34
      %p40 = scmp.eq.s32.totalorder %s21, 0
      %p41 = por %p39, %p40
      %p42 = scmp.ne.s32.totalorder %s31, %s34
      %p43 = scmp.eq.s32.totalorder %s26, 1
      %p44 = por %p42, %p43
      %p45 = scmp.ne.s32.totalorder %s34, %s35
      %p46 = scmp.eq.s32.totalorder %s26, 0
      %p47 = por %p45, %p46
      %p48 = scmp.ne.s32.totalorder %s34, %s35
      %p49 = scmp.eq.s32.totalorder %s27, 1
      %p50 = por %p48, %p49
      %p52 = scmp.ne.s32.totalorder %s35, %s51
      %p53 = scmp.eq.s32.totalorder %s27, 0
      %p54 = por %p52, %p53
      %s55 = ssub.s32 %s21, %s28
      %p56 = scmp.eq.s32.totalorder %s55, 0
      %s58 = sadd.s32 %s57, 1
      %s59 = scalar_select %p56, %s57, %s58
      %p62 = pneg %p56
      %p63 = scmp.eq.s32.totalorder %s21, 1
      %p64 = por %p62, %p63
      %p65 = scmp.ne.s32.totalorder %s57, %s60
      %p66 = scmp.eq.s32.totalorder %s21, 0
      %p67 = por %p65, %p66
      %p68 = scmp.ne.s32.totalorder %s57, %s60
      %p69 = scmp.eq.s32.totalorder %s26, 1
      %p70 = por %p68, %p69
      %p71 = scmp.ne.s32.totalorder %s60, %s61
      %p72 = scmp.eq.s32.totalorder %s26, 0
      %p73 = por %p71, %p72
      %p74 = scmp.ne.s32.totalorder %s60, %s61
      %p75 = scmp.eq.s32.totalorder %s27, 1
      %p76 = por %p74, %p75
      %p78 = scmp.ne.s32.totalorder %s61, %s77
      %p79 = scmp.eq.s32.totalorder %s27, 0
      %p80 = por %p78, %p79
      %s82 = sadd.s32 %s81, 1
      %p85 = scmp.eq.s32.totalorder %s21, 1
      %p86 = scmp.ne.s32.totalorder %s81, %s83
      %p87 = scmp.eq.s32.totalorder %s21, 0
      %p88 = por %p86, %p87
      %p89 = scmp.ne.s32.totalorder %s81, %s83
      %p90 = scmp.eq.s32.totalorder %s26, 1
      %p91 = por %p89, %p90
      %p92 = scmp.ne.s32.totalorder %s83, %s84
      %p93 = scmp.eq.s32.totalorder %s26, 0
      %p94 = por %p92, %p93
      %p95 = scmp.ne.s32.totalorder %s83, %s84
      %p96 = scmp.eq.s32.totalorder %s27, 1
      %p97 = por %p95, %p96
      %p99 = scmp.ne.s32.totalorder %s84, %s98
      %p100 = scmp.eq.s32.totalorder %s27, 0
      %p101 = por %p99, %p100
      %s103 = sadd.s32 %s102, 1
      %p106 = scmp.eq.s32.totalorder %s21, 1
      %p107 = scmp.ne.s32.totalorder %s102, %s104
      %p108 = scmp.eq.s32.totalorder %s21, 0
      %p109 = por %p107, %p108
      %p110 = scmp.ne.s32.totalorder %s102, %s104
      %p111 = scmp.eq.s32.totalorder %s26, 1
      %p112 = por %p110, %p111
      %p113 = scmp.ne.s32.totalorder %s104, %s105
      %p114 = scmp.eq.s32.totalorder %s26, 0
      %p115 = por %p113, %p114
      %p116 = scmp.ne.s32.totalorder %s104, %s105
      %p117 = scmp.eq.s32.totalorder %s27, 1
      %p118 = por %p116, %p117
      %p120 = scmp.ne.s32.totalorder %s105, %s119
      %p121 = scmp.eq.s32.totalorder %s27, 0
      %p122 = por %p120, %p121
      %s124 = sadd.s32 %s123, 1
      %p127 = scmp.eq.s32.totalorder %s21, 1
      %p128 = scmp.ne.s32.totalorder %s123, %s125
      %p129 = scmp.eq.s32.totalorder %s21, 0
      %p130 = por %p128, %p129
      %p131 = scmp.ne.s32.totalorder %s123, %s125
      %p132 = scmp.eq.s32.totalorder %s26, 1
      %p133 = por %p131, %p132
      %p134 = scmp.ne.s32.totalorder %s125, %s126
      %p135 = scmp.eq.s32.totalorder %s26, 0
      %p136 = por %p134, %p135
      %p137 = scmp.ne.s32.totalorder %s125, %s126
      %p138 = scmp.eq.s32.totalorder %s27, 1
      %p139 = por %p137, %p138
      %p141 = scmp.ne.s32.totalorder %s126, %s140
      %p142 = scmp.eq.s32.totalorder %s27, 0
      %p143 = por %p141, %p142
      %s145 = sadd.s32 %s144, 1
      %p148 = scmp.eq.s32.totalorder %s21, 1
      %p149 = scmp.ne.s32.totalorder %s144, %s146
      %p150 = scmp.eq.s32.totalorder %s21, 0
      %p151 = por %p149, %p150
      %p152 = scmp.ne.s32.totalorder %s144, %s146
      %p153 = scmp.eq.s32.totalorder %s26, 1
      %p154 = por %p152, %p153
      %p155 = scmp.ne.s32.totalorder %s146, %s147
      %p156 = scmp.eq.s32.totalorder %s26, 0
      %p157 = por %p155, %p156
      %p158 = scmp.ne.s32.totalorder %s146, %s147
      %p159 = scmp.eq.s32.totalorder %s27, 1
      %p160 = por %p158, %p159
      %p162 = scmp.ne.s32.totalorder %s147, %s161
      %p163 = scmp.eq.s32.totalorder %s27, 0
      %p164 = por %p162, %p163
      %s165 = ssub.s32 %s21, %s28
      %p166 = scmp.eq.s32.totalorder %s165, 0
      %s168 = sadd.s32 %s167, 1
      %s169 = scalar_select %p166, %s167, %s168
      %p172 = pneg %p166
      %p173 = scmp.eq.s32.totalorder %s21, 1
      %p174 = por %p172, %p173
      %p175 = scmp.ne.s32.totalorder %s167, %s170
      %p176 = scmp.eq.s32.totalorder %s21, 0
      %p177 = por %p175, %p176
      %p178 = scmp.ne.s32.totalorder %s167, %s170
      %p179 = scmp.eq.s32.totalorder %s26, 1
      %p180 = por %p178, %p179
      %p181 = scmp.ne.s32.totalorder %s170, %s171
      %p182 = scmp.eq.s32.totalorder %s26, 0
      %p183 = por %p181, %p182
      %p184 = scmp.ne.s32.totalorder %s170, %s171
      %p185 = scmp.eq.s32.totalorder %s27, 1
      %p186 = por %p184, %p185
      %p188 = scmp.ne.s32.totalorder %s171, %s187
      %p189 = scmp.eq.s32.totalorder %s27, 0
      %p190 = por %p188, %p189
      %p191 = scmp.le.s32.totalorder 1, %s21
      %p192 = scmp.lt.s32.totalorder %s21, 3
      %p193 = pnand %p191, %p192
      %p194 = pneg %p193
      // Predicated region
      $region9: #{tpu_custom_call.1} parent=5 // pred_check
        _
      $region10: #{tpu_custom_call.1} parent=5 // pred_check_branch
        %196 = sbr.rel (%p193) target = $region12
      $region11: #{tpu_custom_call.1} parent=5 // pred_region
        %s197 = ssub.s32 %s21, 1
        // Predicated region
        $region13: #{tpu_custom_call.1} parent=11 // pred_check
          %p198 = pneg %p94
        $region14: #{tpu_custom_call.1} parent=11 // pred_check_branch
          %200 = sbr.rel (%p198) target = $region16
        $region15: #{tpu_custom_call.1} parent=11 // pred_region
          %202 = vsyncadd [#allocation6], 0
          %s203 = sshll.u32 %s2, 4
          %s204 = int_to_ptr.hbm [resolvable:$true] %s203
          %s205 = sshll.u32 [#allocation7], 4
          %s206 = int_to_ptr.vmem [resolvable:$true] %s205
          %211 = dma.hbm_to_vmem [thread:$0]  %s204, 1024, %s206, [#allocation6], 128, 128, 8
        $region16: #{tpu_custom_call.1} parent=11 // pred_fallthru
          _
        // Predicated region
        $region17: #{tpu_custom_call.1} parent=11 // pred_check
          %p212 = pneg %p115
        $region18: #{tpu_custom_call.1} parent=11 // pred_check_branch
          %214 = sbr.rel (%p212) target = $region20
        $region19: #{tpu_custom_call.1} parent=11 // pred_region
          _
        $region20: #{tpu_custom_call.1} parent=11 // pred_fallthru
          _
        // Predicated region
        $region21: #{tpu_custom_call.1} parent=11 // pred_check
          %p215 = pneg %p136
        $region22: #{tpu_custom_call.1} parent=11 // pred_check_branch
          %217 = sbr.rel (%p215) target = $region24
        $region23: #{tpu_custom_call.1} parent=11 // pred_region
          _
        $region24: #{tpu_custom_call.1} parent=11 // pred_fallthru
          _
        // Predicated region
        $region25: #{tpu_custom_call.1} parent=11 // pred_check
          %p218 = pneg %p157
        $region26: #{tpu_custom_call.1} parent=11 // pred_check_branch
          %220 = sbr.rel (%p218) target = $region28
        $region27: #{tpu_custom_call.1} parent=11 // pred_region
          _
        $region28: #{tpu_custom_call.1} parent=11 // pred_fallthru
          _
      $region12: #{tpu_custom_call.1} parent=5 // pred_fallthru
        _
      %p221 = scmp.lt.s32.totalorder %s21, 2
      // Predicated region
      $region29: #{tpu_custom_call.1} parent=5 // pred_check
        %p222 = pneg %p221
      $region30: #{tpu_custom_call.1} parent=5 // pred_check_branch
        %224 = sbr.rel (%p222) target = $region32
      $region31: #{tpu_custom_call.1} parent=5 // pred_region
        // Predicated region
        $region33: #{tpu_custom_call.1} parent=31 // pred_check
          %p225 = pneg %p41
        $region34: #{tpu_custom_call.1} parent=31 // pred_check_branch
          %227 = sbr.rel (%p225) target = $region36
        $region35: #{tpu_custom_call.1} parent=31 // pred_region
          %s228 = sand.u32 %s31, 1
          %s229 = scalar_lea.sflag [#allocation3], %s228
          %s230 = sand.u32 %s31, 1
          %s231 = smul.addr %s230, 8
          %s232 = scalar_lea.vmem [#allocation2], %s231
          %234 = vsyncadd %s229, 0
          %s235 = smul.addr %s21, 8
          %s236 = scalar_lea.hbm %s0, %s235
          %s238 = sshll.u32 %s236, 4
          %s239 = int_to_ptr.hbm [resolvable:$true] %s238
          %s240 = sshll.u32 %s232, 4
          %s241 = int_to_ptr.vmem [resolvable:$true] %s240
          %243 = dma.hbm_to_vmem [thread:$0]  %s239, 128, %s241, %s229
        $region36: #{tpu_custom_call.1} parent=31 // pred_fallthru
          _
        // Predicated region
        $region37: #{tpu_custom_call.1} parent=31 // pred_check
          %p244 = pneg %p67
        $region38: #{tpu_custom_call.1} parent=31 // pred_check_branch
          %246 = sbr.rel (%p244) target = $region40
        $region39: #{tpu_custom_call.1} parent=31 // pred_region
          %s247 = sand.u32 %s21, 1
          %s248 = scalar_lea.sflag [#allocation6], %s247
          %s249 = sand.u32 %s57, 1
          %s250 = smul.addr %s249, 8
          %s251 = scalar_lea.vmem [#allocation5], %s250
          %253 = vsyncadd %s248, 0
          %s254 = smul.addr %s21, 8
          %s255 = scalar_lea.hbm %s1, %s254
          %s257 = sshll.u32 %s255, 4
          %s258 = int_to_ptr.hbm [resolvable:$true] %s257
          %s259 = sshll.u32 %s251, 4
          %s260 = int_to_ptr.vmem [resolvable:$true] %s259
          %262 = dma.hbm_to_vmem [thread:$0]  %s258, 128, %s260, %s248
        $region40: #{tpu_custom_call.1} parent=31 // pred_fallthru
          _
      $region32: #{tpu_custom_call.1} parent=5 // pred_fallthru
        _
      %p263 = scmp.le.s32.totalorder 1, %s21
      %p264 = scmp.lt.s32.totalorder %s21, 3
      %p265 = pnand %p263, %p264
      %p266 = pneg %p265
      // Predicated region
      $region41: #{tpu_custom_call.1} parent=5 // pred_check
        _
      $region42: #{tpu_custom_call.1} parent=5 // pred_check_branch
        %268 = sbr.rel (%p265) target = $region44
      $region43: #{tpu_custom_call.1} parent=5 // pred_region
        %s269 = ssub.s32 %s21, 1
        %s270 = sand.u32 %s34, 1
        %s271 = scalar_lea.sflag [#allocation3], %s270
        %s272 = sand.u32 %s34, 1
        %s273 = smul.addr %s272, 8
        %s274 = scalar_lea.vmem [#allocation2], %s273
        // Predicated region
        $region45: #{tpu_custom_call.1} parent=43 // pred_check
          %p275 = pneg %p47
        $region46: #{tpu_custom_call.1} parent=43 // pred_check_branch
          %277 = sbr.rel (%p275) target = $region48
        $region47: #{tpu_custom_call.1} parent=43 // pred_region
          %279 = dma.done %s271, 128
        $region48: #{tpu_custom_call.1} parent=43 // pred_fallthru
          _
        %s280 = sand.u32 %s26, 1
        %s281 = scalar_lea.sflag [#allocation6], %s280
        %s282 = sand.u32 %s60, 1
        %s283 = smul.addr %s282, 8
        %s284 = scalar_lea.vmem [#allocation5], %s283
        // Predicated region
        $region49: #{tpu_custom_call.1} parent=43 // pred_check
          %p285 = pneg %p73
        $region50: #{tpu_custom_call.1} parent=43 // pred_check_branch
          %287 = sbr.rel (%p285) target = $region52
        $region51: #{tpu_custom_call.1} parent=43 // pred_region
          %289 = dma.done %s281, 128
        $region52: #{tpu_custom_call.1} parent=43 // pred_fallthru
          _
        // Predicated region
        $region53: #{tpu_custom_call.1} parent=43 // pred_check
          %p290 = pneg %p94
        $region54: #{tpu_custom_call.1} parent=43 // pred_check_branch
          %292 = sbr.rel (%p290) target = $region56
        $region55: #{tpu_custom_call.1} parent=43 // pred_region
          %294 = dma.done [#allocation6], 1024
        $region56: #{tpu_custom_call.1} parent=43 // pred_fallthru
          _
        %s295 = sand.u32 %s34, 1
        %s296 = scalar_lea.sflag [#allocation3], %s295
        %s297 = sand.u32 %s34, 1
        %s298 = smul.addr %s297, 8
        %s299 = scalar_lea.vmem [#allocation2], %s298
        %p300 = pneg %p47
        %p301 = pneg %p44
        %s302 = sand.u32 %s26, 1
        %s303 = scalar_lea.sflag [#allocation6], %s302
        %s304 = sand.u32 %s60, 1
        %s305 = smul.addr %s304, 8
        %s306 = scalar_lea.vmem [#allocation5], %s305
        %p307 = pneg %p73
        %p308 = pneg %p70
        %p309 = pneg %p94
        %p310 = pneg %p91
        %p311 = pneg %p115
        %p312 = pneg %p112
        %p313 = pneg %p136
        %p314 = pneg %p133
        %p315 = pneg %p157
        %p316 = pneg %p154
        %p317 = pneg %p183
        %p318 = pneg %p180
        %s319 = sand.u32 %s170, 1
        %s320 = scalar_lea.sflag [#allocation4], %s319
        %s321 = sand.u32 %s170, 1
        %s322 = smul.addr %s321, 8
        %s323 = scalar_lea.vmem [#allocation8], %s322
        %v324 = vld [vmem:[%s274] sm:$0xff]
        %v325 = vld [vmem:[#allocation7] sm:$0xff]
        %v326 = vld [vmem:[#allocation7 + $0x8] sm:$0xff]
        %v327 = vld [vmem:[#allocation7 + $0x10] sm:$0xff]
        %v328 = vld [vmem:[#allocation7 + $0x18] sm:$0xff]
        %v329 = vld [vmem:[#allocation7 + $0x20] sm:$0xff]
        %v330 = vld [vmem:[#allocation7 + $0x28] sm:$0xff]
        %v331 = vld [vmem:[#allocation7 + $0x30] sm:$0xff]
        %v332 = vld [vmem:[#allocation7 + $0x38] sm:$0xff]
        %v333 = vld [vmem:[%s3] sm:$0x1]
        %v335 = vperm.slane %v333, 0
        %vm337 = vcmask 523264
        %v339 = vsel %vm337, %v324, 0
        %341 = vmatpush.msra.mxu0 0.0
        %342 = vmatpush.msra.mxu0 0.0
        %343 = vmatpush.msra.mxu0 0.0
        %344 = vmatpush.msra.mxu0 0.0
        %345 = vmatpush.msra.mxu0 0.0
        %346 = vmatpush.msra.mxu0 0.0
        %347 = vmatpush.msra.mxu0 0.0
        %348 = vmatpush.msra.mxu0 0.0
        %349 = vmatpush.msra.mxu0 %v332
        %350 = vmatpush.msra.mxu0 %v331
        %351 = vmatpush.msra.mxu0 %v330
        %352 = vmatpush.msra.mxu0 %v329
        %353 = vmatpush.msra.mxu0 %v328
        %354 = vmatpush.msra.mxu0 %v327
        %355 = vmatpush.msra.mxu0 %v326
        %356 = vmatpush.msra.mxu0 %v325
        %357 = vmatmul.f32.gmra.mxu0 %v339
        %v358 = vpop.f32.mrf.mxu0
        %v359 = vadd.f32 %v335, %v358
        %360 = vdwg.mxu0
        %v361 = vld [vmem:[%s284] sm:$0xff]
        %v362 = vadd.f32 %v361, %v359
        %v363 = vsel %vm337, %v362, 0.0
        %364 = vadd.xlane.f32.xlu0 %v363
        %v365 = vpop.xlane.xlu0 %364
        %v366 = vrcp.pop 64.0
        %v367 = vmul.f32 64.0, %v366
        %v368 = vsub.f32 1.0, %v367
        %v369 = vmul.f32 %v366, %v368
        %v370 = vadd.f32 %v366, %v369
        %vm371 = vweird.f32 %v366
        %v372 = vsel %vm371, %v366, %v370
        %v373 = vmul.f32 %v365, %v372
        %v374 = vsub.f32 %v362, %v373
        %v375 = vmul.f32 %v374, %v374
        %v376 = vsel %vm337, %v375, 0.0
        %377 = vadd.xlane.f32.xlu0 %v376
        %v378 = vpop.xlane.xlu0 %377
        %v379 = vmul.f32 %v378, %v372
        %v380 = vadd.f32 %v379, 1e-12
        %v381 = vrsqrt.pop %v380
        %v382 = vmul.f32 %v381, %v380
        %v383 = vmul.f32 %v382, %v381
        %v384 = vmul.f32 0.5, %v383
        %v385 = vsub.f32 1.5, %v384
        %v386 = vmul.f32 %v381, %v385
        %vm387 = vweird.f32 %v380
        %vm388 = vweird.f32 %v381
        %vm389 = vmor %vm387, %vm388
        %v390 = vsel %vm389, %v381, %v386
        %v391 = vmul.f32 %v374, %v390
        %v392 = vld [vmem:[%s4] sm:$0x1]
        %v394 = vperm.slane %v392, 0
        %v396 = vmul.f32 %v391, %v394
        %v397 = vld [vmem:[%s5] sm:$0x1]
        %v399 = vperm.slane %v397, 0
        %v401 = vadd.f32 %v396, %v399
        %402 = vst.msk [vmem:[%s323] sm:$0xff] %vm337, %v401
        %s403 = sand.u32 %s170, 1
        %s404 = scalar_lea.sflag [#allocation4], %s403
        %s405 = sand.u32 %s170, 1
        %s406 = smul.addr %s405, 8
        %s407 = scalar_lea.vmem [#allocation8], %s406
        // Predicated region
        $region57: #{tpu_custom_call.1} parent=43 // pred_check
          %p408 = pneg %p180
        $region58: #{tpu_custom_call.1} parent=43 // pred_check_branch
          %410 = sbr.rel (%p408) target = $region60
        $region59: #{tpu_custom_call.1} parent=43 // pred_region
          %412 = vsyncadd %s404, 0
          %s413 = smul.addr %s26, 8
          %s414 = scalar_lea.hbm %s6, %s413
          %s416 = sshll.u32 %s407, 4
          %s417 = int_to_ptr.vmem [resolvable:$true] %s416
          %s418 = sshll.u32 %s414, 4
          %s419 = int_to_ptr.hbm [resolvable:$true] %s418
          %421 = dma.vmem_to_hbm [thread:$0]  %s417, 128, %s419, %s404
        $region60: #{tpu_custom_call.1} parent=43 // pred_fallthru
          _
      $region44: #{tpu_custom_call.1} parent=5 // pred_fallthru
        _
      %p422 = scmp.le.s32.totalorder 2, %s21
      // Predicated region
      $region61: #{tpu_custom_call.1} parent=5 // pred_check
        %p423 = pneg %p422
      $region62: #{tpu_custom_call.1} parent=5 // pred_check_branch
        %425 = sbr.rel (%p423) target = $region64
      $region63: #{tpu_custom_call.1} parent=5 // pred_region
        %s426 = ssub.s32 %s21, 2
        // Predicated region
        $region65: #{tpu_custom_call.1} parent=63 // pred_check
          %p427 = pneg %p186
        $region66: #{tpu_custom_call.1} parent=63 // pred_check_branch
          %429 = sbr.rel (%p427) target = $region68
        $region67: #{tpu_custom_call.1} parent=63 // pred_region
          %s430 = sand.u32 %s171, 1
          %s431 = scalar_lea.sflag [#allocation4], %s430
          %s432 = sand.u32 %s171, 1
          %s433 = smul.addr %s432, 8
          %s434 = scalar_lea.vmem [#allocation8], %s433
          %436 = dma.done %s431, 128
        $region68: #{tpu_custom_call.1} parent=63 // pred_fallthru
          _
      $region64: #{tpu_custom_call.1} parent=5 // pred_fallthru
        _
    $region6: #{tpu_custom_call.1} parent=1 // loop_footer
      %s25 = sadd.s32 1, %s21
    $region7: #{tpu_custom_call.1} parent=1 // loop_footer_branch
      %20 = sbr.rel target = $region3
    $region8: #{tpu_custom_call.1} parent=1 // loop_exit
      _
    %437 = vsyncpa [#allocation3], 1
    %s438 = scalar_lea.sflag [#allocation3], 1
    %439 = vsyncpa %s438, 1
    %440 = vsyncpa [#allocation6], 1
    %s441 = scalar_lea.sflag [#allocation6], 1
    %442 = vsyncpa %s441, 1
    %443 = vsyncpa [#allocation4], 1
    %s444 = scalar_lea.sflag [#allocation4], 1
    %445 = vsyncpa %s444, 1

</llo_original>
